<compile_context>
chip_gen: v6e
topology: v6e:2x2x1
jax: 0.10.0
libtpu: 0.0.40
codegen_flags: <defaults>
</compile_context>

<pallas_src>
import functools
import math

import jax
import jax.numpy as jnp
from jax import lax
from jax.experimental import pallas as pl
from jax.experimental.pallas import tpu as pltpu


def _round_up(x: int, m: int) -> int:
    return ((x + m - 1) // m) * m


# ----------------------------------------------------------------------------
# divergence-specific f' (f_prime) and f* (f_star), expressed in jnp.
# ----------------------------------------------------------------------------
def _get_funcs(div: str, a: float, eps: float):
    if div == "kl":
        f_p = lambda u: jnp.log(u + eps) + 1.0
        f_s = lambda t: jnp.exp(t - 1.0)
    elif div == "chi2":
        f_p = lambda u: 2.0 * (u - 1.0)
        f_s = lambda t: 0.25 * t * t + t
    elif div == "js":
        f_p = lambda u: jnp.log(2.0) + jnp.log(u + eps) - jnp.log(1.0 + u)
        f_s = lambda t: -jnp.log(2.0 - jnp.exp(t))
    elif div == "sh":
        f_p = lambda u: 1.0 - lax.rsqrt(u + eps)
        f_s = lambda t: t / (1.0 - t + eps)
    elif div == "tsallis":
        f_p = lambda u: -(a / (a - 1.0)) * jnp.power(u, a - 1.0)
        f_s = lambda t: jnp.power((a - 1.0) * t / a, a / (a - 1.0))
    elif div == "vlc":
        f_p = lambda u: 1.0 - 4.0 / ((u + 1.0) ** 2)
        f_s = lambda t: 4.0 - t - 4.0 * jnp.sqrt(1.0 - t + eps)
    else:
        raise ValueError(f"Unknown divergence type: {div}")
    return f_p, f_s


# ----------------------------------------------------------------------------
# precomposed star(x) = f*(f'(exp(-x))) : minimal EUP pushes for the N^2 term.
# returns (star_fn, transcendentals_per_element, eps_added_in_epilogue)
# ----------------------------------------------------------------------------
def _get_star_fn(div: str, a: float, eps: float, f_p, f_s):
    if div == "kl":
        # exp(log(exp(-x)+eps)+1-1) == exp(-x)+eps; eps re-added in the epilogue.
        return (lambda x: jnp.exp(-x)), 1, True
    if div == "chi2":
        # (u-1)^2 + 2(u-1) == u^2 - 1 == exp(-2x) - 1
        return (lambda x: jnp.exp(-2.0 * x) - 1.0), 1, False
    if div == "js":
        # -log(2 - 2u/(1+u)) == log(1+u) - log 2
        return (lambda x: jnp.log(1.0 + jnp.exp(-x)) - math.log(2.0)), 2, False
    if div == "sh":
        # (1 - u^{-1/2}) / u^{-1/2} == sqrt(u) - 1 == exp(-x/2) - 1
        return (lambda x: jnp.exp(-0.5 * x) - 1.0), 1, False
    if div == "vlc":
        # with r = 1/(u+1): 4 - (1 - 4r^2) - 8r == 3 + 4r^2 - 8r
        def _vlc(x):
            r = 1.0 / (jnp.exp(-x) + 1.0)
            return 3.0 + 4.0 * r * r - 8.0 * r
        return _vlc, 1, False
    if div == "tsallis":
        p = a / (a - 1.0)
        if abs(p - round(p)) < 1e-9:
            # (-u^{a-1})^p == sign * u^a == sign * exp(-a x)   (p integral)
            sign = (-1.0) ** int(round(p))
            return (lambda x: sign * jnp.exp(-a * x)), 1, False
    # generic composition (matches the reference exactly, incl. possible NaNs)
    return (lambda x: f_s(f_p(jnp.exp(-x)))), 3, False


# ----------------------------------------------------------------------------
# fold an (R, C) f32 tile (R % 8 == 0, C % 128 == 0) into an (8, 128) partial
# sum using only tile-aligned slices + VPU adds (no cross-lane XLU reduce).
# ----------------------------------------------------------------------------
def _fold_to_vreg(x):
    r, c = x.shape
    acc = x[:, 0:128]
    for j in range(1, c // 128):
        acc = acc + x[:, j * 128:(j + 1) * 128]
    out = acc[0:8, :]
    for i in range(1, r // 8):
        out = out + acc[i * 8:(i + 1) * 8, :]
    return out


# ----------------------------------------------------------------------------
# Kernel 1: normalize row blocks + positive-pair partial sums.
# ----------------------------------------------------------------------------
def _prep_kernel(z1_ref, z2_ref, z1n_ref, pos_ref, *,
                 n_valid, block_m, inv_two_sigma2, f_p):
    z1 = z1_ref[...]
    z2 = z2_ref[...]

    # F.normalize(x, dim=1): rsqrt + multiply (EUP path, no VPU divide).
    inv1 = lax.rsqrt(jnp.maximum(jnp.sum(z1 * z1, axis=1, keepdims=True), 1e-24))
    inv2 = lax.rsqrt(jnp.maximum(jnp.sum(z2 * z2, axis=1, keepdims=True), 1e-24))
    z1n = z1 * inv1
    z2n = z2 * inv2
    z1n_ref[...] = z1n.astype(z1n_ref.dtype)

    # positive term: f'(exp(-||z1n - z2n||^2 / (2 sigma^2))) per row (f32)
    diff = z1n - z2n
    d_pos = jnp.sum(diff * diff, axis=1, keepdims=True)          # (B, 1)
    s_pos = f_p(jnp.exp(-d_pos * inv_two_sigma2))                # (B, 1)

    # mask padded rows (global row index >= n_valid)
    i = pl.program_id(0)
    row = i * block_m + lax.broadcasted_iota(jnp.int32, s_pos.shape, 0)
    s_pos = jnp.where(row < n_valid, s_pos, 0.0)

    pos_ref[...] = jnp.broadcast_to(jnp.sum(s_pos, keepdims=True), pos_ref.shape)


# ----------------------------------------------------------------------------
# Kernel 2: tiled N x N negative term with per-row-tile (8,128) partial sums.
# ----------------------------------------------------------------------------
def _neg_kernel(zr_ref, zc_ref, star_ref, acc_ref, *,
                n_valid, block, padded, inv_sigma2, star_fn):
    i = pl.program_id(0)
    j = pl.program_id(1)
    num_i = pl.num_programs(0)
    num_j = pl.num_programs(1)

    @pl.when(j == 0)
    def _init():
        acc_ref[...] = jnp.zeros_like(acc_ref)

    # sim[i,j] = <zr_i, zc_j>; contract last dims directly -> no transpose.
    sim = lax.dot_general(zr_ref[...], zc_ref[...],
                          dimension_numbers=(((1,), (1,)), ((), ())),
                          preferred_element_type=jnp.float32)      # (b, b) MXU
    # d2 / (2 sigma^2) == max(1 - sim, 0) / sigma^2  (collapsed VPU chain)
    x = jnp.maximum(1.0 - sim, 0.0) * inv_sigma2
    star = star_fn(x)

    # only diagonal tiles (and padded edge tiles) pay for the iota mask
    needs_mask = i == j
    if padded:
        needs_mask = needs_mask | (i == num_i - 1) | (j == num_j - 1)

    @pl.when(jnp.logical_not(needs_mask))
    def _full():
        acc_ref[...] += _fold_to_vreg(star)

    @pl.when(needs_mask)
    def _masked():
        r = i * block + lax.broadcasted_iota(jnp.int32, star.shape, 0)
        c = j * block + lax.broadcasted_iota(jnp.int32, star.shape, 1)
        ok = (r != c) & (r < n_valid) & (c < n_valid)
        acc_ref[...] += _fold_to_vreg(jnp.where(ok, star, 0.0))

    @pl.when(j == num_j - 1)
    def _finalize():
        star_ref[...] = acc_ref[...]        # lane-dense, unmasked (8,128) store


# ----------------------------------------------------------------------------
# wrapper
# ----------------------------------------------------------------------------
def fmicl_loss(z1, z2, *, div_type: str = "kl", sigma: float = 1.0,
               alpha: float = 1.5, tsallis_alpha: float = 1.5,
               eps: float = 1e-8, block: int = 512,
               dot_dtype=jnp.float32):
    """f-MICL loss.  dot_dtype=jnp.bfloat16 runs the N x N contraction at
    native MXU rates / half the HBM traffic (small accuracy loss from the
    2 - 2*sim cancellation); default f32 keeps reference-level accuracy."""
    assert z1.shape == z2.shape and z1.ndim == 2
    n, d = z1.shape
    div = div_type.lower()
    f_p, f_s = _get_funcs(div, tsallis_alpha, eps)
    star_fn, transc_per_elem, eps_in_epilogue = _get_star_fn(
        div, tsallis_alpha, eps, f_p, f_s)
    inv_two_sigma2 = 1.0 / (2.0 * sigma * sigma)
    inv_sigma2 = 1.0 / (sigma * sigma)

    dot_bytes = jnp.dtype(dot_dtype).itemsize
    d_pad = _round_up(d, 128)

    # ---- tile geometry: lane-aligned, VMEM-budgeted, megacore-aware ----------
    b = _round_up(min(block, n), 128)

    def _vmem_bytes(bb):
        k1 = 2 * (2 * bb * d_pad * 4 + bb * d_pad * dot_bytes + 8 * 128 * 4)
        k2 = (2 * (2 * bb * d_pad * dot_bytes + 8 * 128 * 4)
              + 3 * bb * bb * 4 + 8 * 128 * 4)
        return max(k1, k2)

    budget = 40 << 20              # headroom under v7x's 64 MiB physical VMEM
    while b > 128 and _vmem_bytes(b) > budget:
        b -= 128
    # TODO(synk): for very large D (working set > budget even at b=128) add a
    # trailing "arbitrary" D-tiling axis instead of only raising vmem_limit.

    # prefer >= 2 row tiles (shards the "parallel" axis over v7x's 2 TCs)
    # when splitting introduces no extra padding.
    if (_round_up(n, b) // b < 2 and b % 256 == 0
            and _round_up(n, b // 2) == _round_up(n, b)):
        b //= 2

    n_pad = _round_up(n, b)
    num_i = n_pad // b

    needed = _vmem_bytes(b)
    vmem_limit = (int(min(needed + (8 << 20), 56 << 20))
                  if needed > (12 << 20) else None)

    z1 = z1.astype(jnp.float32)
    z2 = z2.astype(jnp.float32)
    if (n_pad, d_pad) != (n, d):
        z1 = jnp.pad(z1, ((0, n_pad - n), (0, d_pad - d)))
        z2 = jnp.pad(z2, ((0, n_pad - n), (0, d_pad - d)))

    # ---- kernel 1: normalize once + positive-term partials -------------------
    z1n, pos_part = pl.pallas_call(
        functools.partial(_prep_kernel, n_valid=n, block_m=b,
                          inv_two_sigma2=inv_two_sigma2, f_p=f_p),
        out_shape=(jax.ShapeDtypeStruct((n_pad, d_pad), dot_dtype),
                   jax.ShapeDtypeStruct((num_i * 8, 128), jnp.float32)),
        grid=(num_i,),
        in_specs=[pl.BlockSpec((b, d_pad), lambda i: (i, 0)),
                  pl.BlockSpec((b, d_pad), lambda i: (i, 0))],
        out_specs=(pl.BlockSpec((b, d_pad), lambda i: (i, 0)),
                   pl.BlockSpec((8, 128), lambda i: (i, 0))),
        compiler_params=pltpu.CompilerParams(
            dimension_semantics=("parallel",),
            vmem_limit_bytes=vmem_limit),
    )(z1, z2)

    # ---- kernel 2: tiled N x N negative term ---------------------------------
    star_part = pl.pallas_call(
        functools.partial(_neg_kernel, n_valid=n, block=b,
                          padded=(n_pad != n),
                          inv_sigma2=inv_sigma2, star_fn=star_fn),
        out_shape=jax.ShapeDtypeStruct((num_i * 8, 128), jnp.float32),
        grid=(num_i, num_i),
        in_specs=[pl.BlockSpec((b, d_pad), lambda i, j: (i, 0)),   # row tile
                  pl.BlockSpec((b, d_pad), lambda i, j: (j, 0))],  # col tile
        out_specs=pl.BlockSpec((8, 128), lambda i, j: (i, 0)),
        scratch_shapes=[pltpu.VMEM((8, 128), jnp.float32)],
        compiler_params=pltpu.CompilerParams(
            dimension_semantics=("parallel", "arbitrary"),
            vmem_limit_bytes=vmem_limit),
        cost_estimate=pl.CostEstimate(
            flops=2 * n_pad * n_pad * d_pad,
            transcendentals=transc_per_elem * n_pad * n_pad,
            bytes_accessed=(num_i + 1) * n_pad * d_pad * dot_bytes
                           + num_i * 8 * 128 * 4),
    )(z1n, z1n)

    # tiny scalar epilogue on per-tile partials
    pos_sum = jnp.sum(pos_part[::8, 0])
    neg_mean = jnp.sum(star_part) / (n * (n - 1.0))
    if eps_in_epilogue:
        # eps hoisted out of the KL star_fn: summed over exactly the n(n-1)
        # valid off-diagonal entries it contributes exactly eps to the mean.
        neg_mean = neg_mean + eps
    return -pos_sum / n + alpha * neg_mean


# ----------------------------------------------------------------------------
# pure-JAX reference (mirrors the PyTorch forward) for sanity checks
# ----------------------------------------------------------------------------
def _fmicl_ref(z1, z2, *, div_type="kl", sigma=1.0, alpha=1.5,
               tsallis_alpha=1.5, eps=1e-8):
    f_p, f_s = _get_funcs(div_type.lower(), tsallis_alpha, eps)
    z1 = z1 / jnp.maximum(jnp.linalg.norm(z1, axis=1, keepdims=True), 1e-12)
    z2 = z2 / jnp.maximum(jnp.linalg.norm(z2, axis=1, keepdims=True), 1e-12)
    n = z1.shape[0]
    d_pos = jnp.sum((z1 - z2) ** 2, axis=1)
    s_pos = f_p(jnp.exp(-d_pos / (2.0 * sigma ** 2)))
    d2 = jnp.maximum(2.0 - 2.0 * (z1 @ z1.T), 0.0)
    s_neg = f_p(jnp.exp(-d2 / (2.0 * sigma ** 2)))
    star = f_s(s_neg)
    mask = ~jnp.eye(n, dtype=bool)
    star_mean = jnp.sum(jnp.where(mask, star, 0.0)) / (n * (n - 1))
    return -jnp.mean(s_pos) + alpha * star_mean


if __name__ == "__main__":
    key = jax.random.PRNGKey(0)
    k1, k2, k3, k4 = jax.random.split(key, 4)

    # 1) KL fast path, tiny padded shape (single tile, diagonal + edge masking)
    z1 = jax.random.normal(k1, (8, 32), dtype=jnp.float32)
    z2 = jax.random.normal(k2, (8, 32), dtype=jnp.float32)
    out = jax.block_until_ready(fmicl_loss(z1, z2, div_type="kl",
                                           sigma=1.0, alpha=1.5))
    ref = _fmicl_ref(z1, z2, div_type="kl", sigma=1.0, alpha=1.5)
    assert jnp.allclose(out, ref, rtol=1e-4, atol=1e-5), (out, ref)

    # 2) chi2: non-divisible N/D (padding both dims) + precomposed star
    a1 = jax.random.normal(k3, (13, 48), dtype=jnp.float32)
    a2 = jax.random.normal(k4, (13, 48), dtype=jnp.float32)
    out2 = jax.block_until_ready(fmicl_loss(a1, a2, div_type="chi2",
                                            sigma=0.7, alpha=1.0))
    ref2 = _fmicl_ref(a1, a2, div_type="chi2", sigma=0.7, alpha=1.0)
    assert jnp.allclose(out2, ref2, rtol=1e-4, atol=1e-5), (out2, ref2)

    # 3) js: multi-tile 2x2 grid (row-tile split heuristic, accumulator across
    #    column tiles, padded edge tiles, precomposed js star)
    b1 = jax.random.normal(k1, (200, 64), dtype=jnp.float32)
    b2 = jax.random.normal(k2, (200, 64), dtype=jnp.float32)
    out3 = jax.block_until_ready(fmicl_loss(b1, b2, div_type="js",
                                            sigma=0.8, alpha=1.2))
    ref3 = _fmicl_ref(b1, b2, div_type="js", sigma=0.8, alpha=1.2)
    assert jnp.allclose(out3, ref3, rtol=1e-4, atol=1e-5), (out3, ref3)

    # 4) KL with the bf16 MXU path (relaxed tolerance per review's note on the
    #    2 - 2*sim cancellation)
    c1 = jax.random.normal(k3, (96, 256), dtype=jnp.float32)
    c2 = jax.random.normal(k4, (96, 256), dtype=jnp.float32)
    out4 = jax.block_until_ready(fmicl_loss(c1, c2, div_type="kl", sigma=1.0,
                                            alpha=1.5, dot_dtype=jnp.bfloat16))
    ref4 = _fmicl_ref(c1, c2, div_type="kl", sigma=1.0, alpha=1.5)
    assert jnp.allclose(out4, ref4, rtol=5e-3, atol=5e-3), (out4, ref4)

    print("KERNEL_OK")
</pallas_src>

<mosaic_0001>
module attributes {stable_mosaic.version = 11 : i64} {
  func.func @_prep_kernel(%arg0: i32, %arg1: memref<128x128xf32, #tpu.memory_space<vmem>>, %arg2: memref<128x128xf32, #tpu.memory_space<vmem>>, %arg3: memref<128x128xf32, #tpu.memory_space<vmem>>, %arg4: memref<8x128xf32, #tpu.memory_space<vmem>>) attributes {dimension_semantics = [#tpu.dimension_semantics<parallel>], iteration_bounds = array<i64: 1>, scalar_prefetch = 0 : i64, scratch_operands = 0 : i64, tpu.core_type = #tpu.core_type<tc>, window_params = [{transform_indices = @transform_0, window_bounds = array<i64: 128, 128>}, {transform_indices = @transform_1, window_bounds = array<i64: 128, 128>}, {transform_indices = @transform_2, window_bounds = array<i64: 128, 128>}, {transform_indices = @transform_3, window_bounds = array<i64: 8, 128>}]} {
    %c0 = arith.constant 0 : index
    %c0_0 = arith.constant 0 : index
    %0 = vector.load %arg1[%c0, %c0_0] : memref<128x128xf32, #tpu.memory_space<vmem>>, vector<128x128xf32>
    %c0_1 = arith.constant 0 : index
    %c0_2 = arith.constant 0 : index
    %1 = vector.load %arg2[%c0_1, %c0_2] : memref<128x128xf32, #tpu.memory_space<vmem>>, vector<128x128xf32>
    %2 = arith.mulf %0, %0 : vector<128x128xf32>
    %cst = arith.constant dense<0.000000e+00> : vector<128xf32>
    %3 = vector.multi_reduction <add>, %2, %cst [1] : vector<128x128xf32> to vector<128xf32>
    %4 = vector.shape_cast %3 : vector<128xf32> to vector<128x1xf32>
    %cst_3 = arith.constant 1.000000e-24 : f32
    %5 = vector.broadcast %cst_3 : f32 to vector<128x1xf32>
    %6 = arith.maximumf %4, %5 : vector<128x1xf32>
    %7 = math.rsqrt %6 : vector<128x1xf32>
    %8 = arith.mulf %1, %1 : vector<128x128xf32>
    %cst_4 = arith.constant dense<0.000000e+00> : vector<128xf32>
    %9 = vector.multi_reduction <add>, %8, %cst_4 [1] : vector<128x128xf32> to vector<128xf32>
    %10 = vector.shape_cast %9 : vector<128xf32> to vector<128x1xf32>
    %cst_5 = arith.constant 1.000000e-24 : f32
    %11 = vector.broadcast %cst_5 : f32 to vector<128x1xf32>
    %12 = arith.maximumf %10, %11 : vector<128x1xf32>
    %13 = math.rsqrt %12 : vector<128x1xf32>
    %14 = vector.broadcast %7 : vector<128x1xf32> to vector<128x128xf32>
    %15 = arith.mulf %0, %14 : vector<128x128xf32>
    %16 = vector.broadcast %13 : vector<128x1xf32> to vector<128x128xf32>
    %17 = arith.mulf %1, %16 : vector<128x128xf32>
    %c0_6 = arith.constant 0 : index
    %c0_7 = arith.constant 0 : index
    %18 = vector.load %arg3[%c0_6, %c0_7] : memref<128x128xf32, #tpu.memory_space<vmem>>, vector<128x128xf32>
    tpu.vector_store %arg3[%c0_6, %c0_7], %15 {strides = array<i32>} : memref<128x128xf32, #tpu.memory_space<vmem>>, vector<128x128xf32>,
    %19 = arith.subf %15, %17 : vector<128x128xf32>
    %20 = arith.mulf %19, %19 : vector<128x128xf32>
    %cst_8 = arith.constant dense<0.000000e+00> : vector<128xf32>
    %21 = vector.multi_reduction <add>, %20, %cst_8 [1] : vector<128x128xf32> to vector<128xf32>
    %22 = vector.shape_cast %21 : vector<128xf32> to vector<128x1xf32>
    %cst_9 = arith.constant 0.000000e+00 : f32
    %23 = vector.broadcast %cst_9 : f32 to vector<128x1xf32>
    %24 = arith.subf %23, %22 : vector<128x1xf32>
    %cst_10 = arith.constant 5.000000e-01 : f32
    %25 = vector.broadcast %cst_10 : f32 to vector<128x1xf32>
    %26 = arith.mulf %24, %25 : vector<128x1xf32>
    %27 = math.exp %26 : vector<128x1xf32>
    %cst_11 = arith.constant 9.99999993E-9 : f32
    %28 = vector.broadcast %cst_11 : f32 to vector<128x1xf32>
    %29 = arith.addf %27, %28 : vector<128x1xf32>
    %30 = math.log %29 : vector<128x1xf32>
    %cst_12 = arith.constant 1.000000e+00 : f32
    %31 = vector.broadcast %cst_12 : f32 to vector<128x1xf32>
    %32 = arith.addf %30, %31 : vector<128x1xf32>
    %c128_i32 = arith.constant 128 : i32
    %33 = arith.muli %arg0, %c128_i32 : i32
    %34 = tpu.iota {dimensions = array<i32: 0>} : vector<128x1xi32>
    %35 = vector.broadcast %33 : i32 to vector<128x1xi32>
    %36 = arith.addi %35, %34 : vector<128x1xi32>
    %c8_i32 = arith.constant 8 : i32
    %37 = vector.broadcast %c8_i32 : i32 to vector<128x1xi32>
    %38 = arith.cmpi slt, %36, %37 : vector<128x1xi32>
    %cst_13 = arith.constant 0.000000e+00 : f32
    %39 = vector.broadcast %cst_13 : f32 to vector<128x1xf32>
    %40 = arith.select %38, %32, %39 : vector<128x1xi1>, vector<128x1xf32>
    %41 = vector.shape_cast %40 : vector<128x1xf32> to vector<1x128x1xf32>
    %cst_14 = arith.constant dense<0.000000e+00> : vector<1xf32>
    %42 = vector.multi_reduction <add>, %41, %cst_14 [1, 2] : vector<1x128x1xf32> to vector<1xf32>
    %43 = vector.shape_cast %42 : vector<1xf32> to vector<1x1x1xf32>
    %44 = vector.extract %43[0, 0, 0] : f32 from vector<1x1x1xf32>
    %45 = vector.broadcast %44 : f32 to vector<1x1xf32>
    %46 = vector.shape_cast %45 : vector<1x1xf32> to vector<1x1xf32>
    %47 = vector.broadcast %46 : vector<1x1xf32> to vector<8x128xf32>
    %c0_15 = arith.constant 0 : index
    %c0_16 = arith.constant 0 : index
    %48 = vector.load %arg4[%c0_15, %c0_16] : memref<8x128xf32, #tpu.memory_space<vmem>>, vector<8x128xf32>
    tpu.vector_store %arg4[%c0_15, %c0_16], %47 {strides = array<i32>} : memref<8x128xf32, #tpu.memory_space<vmem>>, vector<8x128xf32>,
    return
  }
  func.func @transform_0(%arg0: i32) -> (i32, i32) {
    %c0_i32 = arith.constant 0 : i32
    %c0_i32_0 = arith.constant 0 : i32
    return %arg0, %c0_i32 : i32, i32
  }
  func.func @transform_1(%arg0: i32) -> (i32, i32) {
    %c0_i32 = arith.constant 0 : i32
    %c0_i32_0 = arith.constant 0 : i32
    return %arg0, %c0_i32 : i32, i32
  }
  func.func @transform_2(%arg0: i32) -> (i32, i32) {
    %c0_i32 = arith.constant 0 : i32
    %c0_i32_0 = arith.constant 0 : i32
    return %arg0, %c0_i32 : i32, i32
  }
  func.func @transform_3(%arg0: i32) -> (i32, i32) {
    %c0_i32 = arith.constant 0 : i32
    %c0_i32_0 = arith.constant 0 : i32
    return %arg0, %c0_i32 : i32, i32
  }
}

</mosaic_0001>

<llo_original>
// kernel: tpu_custom_call.1
$region0: #{tpu_custom_call.1}
  #allocation0 [shape = 'u32[]', space=smem, size = 0x4, offset = 0x4, fixed_abs, tag = 'smem constant byte address 0x4 - core index']
  #allocation1 [shape = 'u32[144,128]{1,0:T(1,128)}', space=vmem, size = 0x12000, scoped, tag = 'internal scratch']
  %s0 = inlined_call_operand.hbm [shape: f32[128,128], index: 0, kind: input, shape index: {}]
  %s1 = inlined_call_operand.hbm [shape: f32[128,128], index: 1, kind: input, shape index: {}]
  %s2 = inlined_call_operand.hbm [shape: f32[128,128], index: 2, kind: output, shape index: {0}]
  %s3 = inlined_call_operand.hbm [shape: f32[8,128], index: 3, kind: output, shape index: {1}]
  %4 = xla_tuple %s2, %s3
  %s5 = sld [smem:[#allocation0]]
  $region34: #{tpu_custom_call.1} parent=0
    _
  %s7 = ssub.s32 1, %s5
  %s8 = scalar_select 0, %s7, %s5
  $region1: #{tpu_custom_call.1} parent=0
    #allocation2 [shape = 'u8[65536]{0}', space=vmem, size = 0x10000, scoped, tag = 'input window, operand 0, single buffered']
    #allocation3 [shape = 's32[1]{0}', space=sflag, size = 0x4, scoped, tag = 'scoped memory for tpu_custom_call.1']
    #allocation4 [shape = 's32[1]{0}', space=sflag, size = 0x4, scoped, tag = 'scoped memory for tpu_custom_call.1']
    #allocation5 [shape = 'u8[65536]{0}', space=vmem, size = 0x10000, scoped, tag = 'input window, operand 1, single buffered']
    #allocation6 [shape = 's32[1]{0}', space=sflag, size = 0x4, scoped, tag = 'scoped memory for tpu_custom_call.1']
    #allocation7 [shape = 'u8[65536]{0}', space=vmem, size = 0x10000, scoped, tag = 'output window, operand 0, single buffered']
    #allocation8 [shape = 'u8[4096]{0}', space=vmem, size = 0x1000, scoped, tag = 'output window, operand 1, single buffered']
    #allocation9 [shape = 's32[1]{0}', space=sflag, size = 0x4, scoped, tag = 'scoped memory for tpu_custom_call.1']
    %9 = vsyncpa [#allocation3], 0
    %10 = vsyncpa [#allocation6], 0
    %11 = vsyncpa [#allocation4], 0
    %12 = vsyncpa [#allocation9], 0
    // Predicated region
    $region2: #{tpu_custom_call.1} parent=1 // pred_check
      _
    $region3: #{tpu_custom_call.1} parent=1 // pred_check_branch
      %14 = sbr.rel (0) target = $region5
    $region4: #{tpu_custom_call.1} parent=1 // pred_region
      %s16 = ssub.s32 2048, 2048
      %17 = vsyncadd [#allocation3], %s16
      %s18 = sshll.u32 [#allocation2], 4
      %s19 = int_to_ptr.vmem [resolvable:$true] %s18
      %24 = dma.hbm_to_vmem [thread:$0]  %s0, 2048, %s19, [#allocation3], 128, 128, 8
    $region5: #{tpu_custom_call.1} parent=1 // pred_fallthru
      _
    // Predicated region
    $region6: #{tpu_custom_call.1} parent=1 // pred_check
      _
    $region7: #{tpu_custom_call.1} parent=1 // pred_check_branch
      %26 = sbr.rel (0) target = $region9
    $region8: #{tpu_custom_call.1} parent=1 // pred_region
      %s28 = ssub.s32 2048, 2048
      %29 = vsyncadd [#allocation6], %s28
      %s30 = sshll.u32 [#allocation5], 4
      %s31 = int_to_ptr.vmem [resolvable:$true] %s30
      %36 = dma.hbm_to_vmem [thread:$0]  %s1, 2048, %s31, [#allocation6], 128, 128, 8
    $region9: #{tpu_custom_call.1} parent=1 // pred_fallthru
      _
    // Predicated region
    $region10: #{tpu_custom_call.1} parent=1 // pred_check
      _
    $region11: #{tpu_custom_call.1} parent=1 // pred_check_branch
      %38 = sbr.rel (0) target = $region13
    $region12: #{tpu_custom_call.1} parent=1 // pred_region
      %39 = dma.done [#allocation3], 2048
    $region13: #{tpu_custom_call.1} parent=1 // pred_fallthru
      _
    // Predicated region
    $region14: #{tpu_custom_call.1} parent=1 // pred_check
      _
    $region15: #{tpu_custom_call.1} parent=1 // pred_check_branch
      %41 = sbr.rel (0) target = $region17
    $region16: #{tpu_custom_call.1} parent=1 // pred_region
      %42 = dma.done [#allocation6], 2048
    $region17: #{tpu_custom_call.1} parent=1 // pred_fallthru
      _
    %v43 = vld [vmem:[#allocation2] sm:$0xff]
    %v44 = vld [vmem:[#allocation2 + $0x8] sm:$0xff]
    %v45 = vld [vmem:[#allocation2 + $0x10] sm:$0xff]
    %v46 = vld [vmem:[#allocation2 + $0x18] sm:$0xff]
    %v47 = vld [vmem:[#allocation2 + $0x20] sm:$0xff]
    %v48 = vld [vmem:[#allocation2 + $0x28] sm:$0xff]
    %v49 = vld [vmem:[#allocation2 + $0x30] sm:$0xff]
    %v50 = vld [vmem:[#allocation2 + $0x38] sm:$0xff]
    %v51 = vld [vmem:[#allocation2 + $0x40] sm:$0xff]
    %v52 = vld [vmem:[#allocation2 + $0x48] sm:$0xff]
    %v53 = vld [vmem:[#allocation2 + $0x50] sm:$0xff]
    %v54 = vld [vmem:[#allocation2 + $0x58] sm:$0xff]
    %v55 = vld [vmem:[#allocation2 + $0x60] sm:$0xff]
    %v56 = vld [vmem:[#allocation2 + $0x68] sm:$0xff]
    %v57 = vld [vmem:[#allocation2 + $0x70] sm:$0xff]
    %v58 = vld [vmem:[#allocation2 + $0x78] sm:$0xff]
    %v59 = vld [vmem:[#allocation5] sm:$0xff]
    %v60 = vld [vmem:[#allocation5 + $0x8] sm:$0xff]
    %v61 = vld [vmem:[#allocation5 + $0x10] sm:$0xff]
    %v62 = vld [vmem:[#allocation5 + $0x18] sm:$0xff]
    %v63 = vld [vmem:[#allocation5 + $0x20] sm:$0xff]
    %v64 = vld [vmem:[#allocation5 + $0x28] sm:$0xff]
    %v65 = vld [vmem:[#allocation5 + $0x30] sm:$0xff]
    %v66 = vld [vmem:[#allocation5 + $0x38] sm:$0xff]
    %v67 = vld [vmem:[#allocation5 + $0x40] sm:$0xff]
    %v68 = vld [vmem:[#allocation5 + $0x48] sm:$0xff]
    %v69 = vld [vmem:[#allocation5 + $0x50] sm:$0xff]
    %v70 = vld [vmem:[#allocation5 + $0x58] sm:$0xff]
    %v71 = vld [vmem:[#allocation5 + $0x60] sm:$0xff]
    %v72 = vld [vmem:[#allocation5 + $0x68] sm:$0xff]
    %v73 = vld [vmem:[#allocation5 + $0x70] sm:$0xff]
    %v74 = vld [vmem:[#allocation5 + $0x78] sm:$0xff]
    %v75 = vmul.f32 %v43, %v43
    %v76 = vmul.f32 %v44, %v44
    %v77 = vmul.f32 %v45, %v45
    %v78 = vmul.f32 %v46, %v46
    %v79 = vmul.f32 %v47, %v47
    %v80 = vmul.f32 %v48, %v48
    %v81 = vmul.f32 %v49, %v49
    %v82 = vmul.f32 %v50, %v50
    %v83 = vmul.f32 %v51, %v51
    %v84 = vmul.f32 %v52, %v52
    %v85 = vmul.f32 %v53, %v53
    %v86 = vmul.f32 %v54, %v54
    %v87 = vmul.f32 %v55, %v55
    %v88 = vmul.f32 %v56, %v56
    %v89 = vmul.f32 %v57, %v57
    %v90 = vmul.f32 %v58, %v58
    %91 = vadd.xlane.f32.xlu0 %v75
    %v92 = vpop.xlane.xlu0 %91
    %93 = vadd.xlane.f32.xlu0 %v76
    %v94 = vpop.xlane.xlu0 %93
    %95 = vadd.xlane.f32.xlu0 %v77
    %v96 = vpop.xlane.xlu0 %95
    %97 = vadd.xlane.f32.xlu0 %v78
    %v98 = vpop.xlane.xlu0 %97
    %99 = vadd.xlane.f32.xlu0 %v79
    %v100 = vpop.xlane.xlu0 %99
    %101 = vadd.xlane.f32.xlu0 %v80
    %v102 = vpop.xlane.xlu0 %101
    %103 = vadd.xlane.f32.xlu0 %v81
    %v104 = vpop.xlane.xlu0 %103
    %105 = vadd.xlane.f32.xlu0 %v82
    %v106 = vpop.xlane.xlu0 %105
    %107 = vadd.xlane.f32.xlu0 %v83
    %v108 = vpop.xlane.xlu0 %107
    %109 = vadd.xlane.f32.xlu0 %v84
    %v110 = vpop.xlane.xlu0 %109
    %111 = vadd.xlane.f32.xlu0 %v85
    %v112 = vpop.xlane.xlu0 %111
    %113 = vadd.xlane.f32.xlu0 %v86
    %v114 = vpop.xlane.xlu0 %113
    %115 = vadd.xlane.f32.xlu0 %v87
    %v116 = vpop.xlane.xlu0 %115
    %117 = vadd.xlane.f32.xlu0 %v88
    %v118 = vpop.xlane.xlu0 %117
    %119 = vadd.xlane.f32.xlu0 %v89
    %v120 = vpop.xlane.xlu0 %119
    %121 = vadd.xlane.f32.xlu0 %v90
    %v122 = vpop.xlane.xlu0 %121
    %v123 = vmax.f32 %v92, 1e-24
    %v124 = vmax.f32 %v94, 1e-24
    %v125 = vmax.f32 %v96, 1e-24
    %v126 = vmax.f32 %v98, 1e-24
    %v127 = vmax.f32 %v100, 1e-24
    %v128 = vmax.f32 %v102, 1e-24
    %v129 = vmax.f32 %v104, 1e-24
    %v130 = vmax.f32 %v106, 1e-24
    %v131 = vmax.f32 %v108, 1e-24
    %v132 = vmax.f32 %v110, 1e-24
    %v133 = vmax.f32 %v112, 1e-24
    %v134 = vmax.f32 %v114, 1e-24
    %v135 = vmax.f32 %v116, 1e-24
    %v136 = vmax.f32 %v118, 1e-24
    %v137 = vmax.f32 %v120, 1e-24
    %v138 = vmax.f32 %v122, 1e-24
    %v139 = vrsqrt.pop %v123
    %v140 = vrsqrt.pop %v124
    %v141 = vrsqrt.pop %v125
    %v142 = vrsqrt.pop %v126
    %v143 = vrsqrt.pop %v127
    %v144 = vrsqrt.pop %v128
    %v145 = vrsqrt.pop %v129
    %v146 = vrsqrt.pop %v130
    %v147 = vrsqrt.pop %v131
    %v148 = vrsqrt.pop %v132
    %v149 = vrsqrt.pop %v133
    %v150 = vrsqrt.pop %v134
    %v151 = vrsqrt.pop %v135
    %v152 = vrsqrt.pop %v136
    %v153 = vrsqrt.pop %v137
    %v154 = vrsqrt.pop %v138
    %v155 = vmul.f32 %v59, %v59
    %v156 = vmul.f32 %v60, %v60
    %v157 = vmul.f32 %v61, %v61
    %v158 = vmul.f32 %v62, %v62
    %v159 = vmul.f32 %v63, %v63
    %v160 = vmul.f32 %v64, %v64
    %v161 = vmul.f32 %v65, %v65
    %v162 = vmul.f32 %v66, %v66
    %v163 = vmul.f32 %v67, %v67
    %v164 = vmul.f32 %v68, %v68
    %v165 = vmul.f32 %v69, %v69
    %v166 = vmul.f32 %v70, %v70
    %v167 = vmul.f32 %v71, %v71
    %v168 = vmul.f32 %v72, %v72
    %v169 = vmul.f32 %v73, %v73
    %v170 = vmul.f32 %v74, %v74
    %171 = vadd.xlane.f32.xlu0 %v155
    %v172 = vpop.xlane.xlu0 %171
    %173 = vadd.xlane.f32.xlu0 %v156
    %v174 = vpop.xlane.xlu0 %173
    %175 = vadd.xlane.f32.xlu0 %v157
    %v176 = vpop.xlane.xlu0 %175
    %177 = vadd.xlane.f32.xlu0 %v158
    %v178 = vpop.xlane.xlu0 %177
    %179 = vadd.xlane.f32.xlu0 %v159
    %v180 = vpop.xlane.xlu0 %179
    %181 = vadd.xlane.f32.xlu0 %v160
    %v182 = vpop.xlane.xlu0 %181
    %183 = vadd.xlane.f32.xlu0 %v161
    %v184 = vpop.xlane.xlu0 %183
    %185 = vadd.xlane.f32.xlu0 %v162
    %v186 = vpop.xlane.xlu0 %185
    %187 = vadd.xlane.f32.xlu0 %v163
    %v188 = vpop.xlane.xlu0 %187
    %189 = vadd.xlane.f32.xlu0 %v164
    %v190 = vpop.xlane.xlu0 %189
    %191 = vadd.xlane.f32.xlu0 %v165
    %v192 = vpop.xlane.xlu0 %191
    %193 = vadd.xlane.f32.xlu0 %v166
    %v194 = vpop.xlane.xlu0 %193
    %195 = vadd.xlane.f32.xlu0 %v167
    %v196 = vpop.xlane.xlu0 %195
    %197 = vadd.xlane.f32.xlu0 %v168
    %v198 = vpop.xlane.xlu0 %197
    %199 = vadd.xlane.f32.xlu0 %v169
    %v200 = vpop.xlane.xlu0 %199
    %201 = vadd.xlane.f32.xlu0 %v170
    %v202 = vpop.xlane.xlu0 %201
    %v203 = vmax.f32 %v172, 1e-24
    %v204 = vmax.f32 %v174, 1e-24
    %v205 = vmax.f32 %v176, 1e-24
    %v206 = vmax.f32 %v178, 1e-24
    %v207 = vmax.f32 %v180, 1e-24
    %v208 = vmax.f32 %v182, 1e-24
    %v209 = vmax.f32 %v184, 1e-24
    %v210 = vmax.f32 %v186, 1e-24
    %v211 = vmax.f32 %v188, 1e-24
    %v212 = vmax.f32 %v190, 1e-24
    %v213 = vmax.f32 %v192, 1e-24
    %v214 = vmax.f32 %v194, 1e-24
    %v215 = vmax.f32 %v196, 1e-24
    %v216 = vmax.f32 %v198, 1e-24
    %v217 = vmax.f32 %v200, 1e-24
    %v218 = vmax.f32 %v202, 1e-24
    %v219 = vrsqrt.pop %v203
    %v220 = vrsqrt.pop %v204
    %v221 = vrsqrt.pop %v205
    %v222 = vrsqrt.pop %v206
    %v223 = vrsqrt.pop %v207
    %v224 = vrsqrt.pop %v208
    %v225 = vrsqrt.pop %v209
    %v226 = vrsqrt.pop %v210
    %v227 = vrsqrt.pop %v211
    %v228 = vrsqrt.pop %v212
    %v229 = vrsqrt.pop %v213
    %v230 = vrsqrt.pop %v214
    %v231 = vrsqrt.pop %v215
    %v232 = vrsqrt.pop %v216
    %v233 = vrsqrt.pop %v217
    %v234 = vrsqrt.pop %v218
    %v235 = vmul.f32 %v43, %v139
    %v236 = vmul.f32 %v44, %v140
    %v237 = vmul.f32 %v45, %v141
    %v238 = vmul.f32 %v46, %v142
    %v239 = vmul.f32 %v47, %v143
    %v240 = vmul.f32 %v48, %v144
    %v241 = vmul.f32 %v49, %v145
    %v242 = vmul.f32 %v50, %v146
    %v243 = vmul.f32 %v51, %v147
    %v244 = vmul.f32 %v52, %v148
    %v245 = vmul.f32 %v53, %v149
    %v246 = vmul.f32 %v54, %v150
    %v247 = vmul.f32 %v55, %v151
    %v248 = vmul.f32 %v56, %v152
    %v249 = vmul.f32 %v57, %v153
    %v250 = vmul.f32 %v58, %v154
    %v251 = vmul.f32 %v59, %v219
    %v252 = vmul.f32 %v60, %v220
    %v253 = vmul.f32 %v61, %v221
    %v254 = vmul.f32 %v62, %v222
    %v255 = vmul.f32 %v63, %v223
    %v256 = vmul.f32 %v64, %v224
    %v257 = vmul.f32 %v65, %v225
    %v258 = vmul.f32 %v66, %v226
    %v259 = vmul.f32 %v67, %v227
    %v260 = vmul.f32 %v68, %v228
    %v261 = vmul.f32 %v69, %v229
    %v262 = vmul.f32 %v70, %v230
    %v263 = vmul.f32 %v71, %v231
    %v264 = vmul.f32 %v72, %v232
    %v265 = vmul.f32 %v73, %v233
    %v266 = vmul.f32 %v74, %v234
    %267 = vst [vmem:[#allocation7] sm:$0xff] %v235
    %268 = vst [vmem:[#allocation7 + $0x8] sm:$0xff] %v236
    %269 = vst [vmem:[#allocation7 + $0x10] sm:$0xff] %v237
    %270 = vst [vmem:[#allocation7 + $0x18] sm:$0xff] %v238
    %271 = vst [vmem:[#allocation7 + $0x20] sm:$0xff] %v239
    %272 = vst [vmem:[#allocation7 + $0x28] sm:$0xff] %v240
    %273 = vst [vmem:[#allocation7 + $0x30] sm:$0xff] %v241
    %274 = vst [vmem:[#allocation7 + $0x38] sm:$0xff] %v242
    %275 = vst [vmem:[#allocation7 + $0x40] sm:$0xff] %v243
    %276 = vst [vmem:[#allocation7 + $0x48] sm:$0xff] %v244
    %277 = vst [vmem:[#allocation7 + $0x50] sm:$0xff] %v245
    %278 = vst [vmem:[#allocation7 + $0x58] sm:$0xff] %v246
    %279 = vst [vmem:[#allocation7 + $0x60] sm:$0xff] %v247
    %280 = vst [vmem:[#allocation7 + $0x68] sm:$0xff] %v248
    %281 = vst [vmem:[#allocation7 + $0x70] sm:$0xff] %v249
    %282 = vst [vmem:[#allocation7 + $0x78] sm:$0xff] %v250
    %v283 = vsub.f32 %v235, %v251
    %v284 = vsub.f32 %v236, %v252
    %v285 = vsub.f32 %v237, %v253
    %v286 = vsub.f32 %v238, %v254
    %v287 = vsub.f32 %v239, %v255
    %v288 = vsub.f32 %v240, %v256
    %v289 = vsub.f32 %v241, %v257
    %v290 = vsub.f32 %v242, %v258
    %v291 = vsub.f32 %v243, %v259
    %v292 = vsub.f32 %v244, %v260
    %v293 = vsub.f32 %v245, %v261
    %v294 = vsub.f32 %v246, %v262
    %v295 = vsub.f32 %v247, %v263
    %v296 = vsub.f32 %v248, %v264
    %v297 = vsub.f32 %v249, %v265
    %v298 = vsub.f32 %v250, %v266
    %v299 = vmul.f32 %v283, %v283
    %v300 = vmul.f32 %v284, %v284
    %v301 = vmul.f32 %v285, %v285
    %v302 = vmul.f32 %v286, %v286
    %v303 = vmul.f32 %v287, %v287
    %v304 = vmul.f32 %v288, %v288
    %v305 = vmul.f32 %v289, %v289
    %v306 = vmul.f32 %v290, %v290
    %v307 = vmul.f32 %v291, %v291
    %v308 = vmul.f32 %v292, %v292
    %v309 = vmul.f32 %v293, %v293
    %v310 = vmul.f32 %v294, %v294
    %v311 = vmul.f32 %v295, %v295
    %v312 = vmul.f32 %v296, %v296
    %v313 = vmul.f32 %v297, %v297
    %v314 = vmul.f32 %v298, %v298
    %315 = vadd.xlane.f32.xlu0 %v299
    %v316 = vpop.xlane.xlu0 %315
    %317 = vadd.xlane.f32.xlu0 %v300
    %v318 = vpop.xlane.xlu0 %317
    %319 = vadd.xlane.f32.xlu0 %v301
    %v320 = vpop.xlane.xlu0 %319
    %321 = vadd.xlane.f32.xlu0 %v302
    %v322 = vpop.xlane.xlu0 %321
    %323 = vadd.xlane.f32.xlu0 %v303
    %v324 = vpop.xlane.xlu0 %323
    %325 = vadd.xlane.f32.xlu0 %v304
    %v326 = vpop.xlane.xlu0 %325
    %327 = vadd.xlane.f32.xlu0 %v305
    %v328 = vpop.xlane.xlu0 %327
    %329 = vadd.xlane.f32.xlu0 %v306
    %v330 = vpop.xlane.xlu0 %329
    %331 = vadd.xlane.f32.xlu0 %v307
    %v332 = vpop.xlane.xlu0 %331
    %333 = vadd.xlane.f32.xlu0 %v308
    %v334 = vpop.xlane.xlu0 %333
    %335 = vadd.xlane.f32.xlu0 %v309
    %v336 = vpop.xlane.xlu0 %335
    %337 = vadd.xlane.f32.xlu0 %v310
    %v338 = vpop.xlane.xlu0 %337
    %339 = vadd.xlane.f32.xlu0 %v311
    %v340 = vpop.xlane.xlu0 %339
    %341 = vadd.xlane.f32.xlu0 %v312
    %v342 = vpop.xlane.xlu0 %341
    %343 = vadd.xlane.f32.xlu0 %v313
    %v344 = vpop.xlane.xlu0 %343
    %345 = vadd.xlane.f32.xlu0 %v314
    %v346 = vpop.xlane.xlu0 %345
    %v347 = vsub.f32 0.0, %v316
    %v348 = vsub.f32 0.0, %v318
    %v349 = vsub.f32 0.0, %v320
    %v350 = vsub.f32 0.0, %v322
    %v351 = vsub.f32 0.0, %v324
    %v352 = vsub.f32 0.0, %v326
    %v353 = vsub.f32 0.0, %v328
    %v354 = vsub.f32 0.0, %v330
    %v355 = vsub.f32 0.0, %v332
    %v356 = vsub.f32 0.0, %v334
    %v357 = vsub.f32 0.0, %v336
    %v358 = vsub.f32 0.0, %v338
    %v359 = vsub.f32 0.0, %v340
    %v360 = vsub.f32 0.0, %v342
    %v361 = vsub.f32 0.0, %v344
    %v362 = vsub.f32 0.0, %v346
    %v363 = vmul.f32 %v347, 0.5
    %v364 = vmul.f32 %v348, 0.5
    %v365 = vmul.f32 %v349, 0.5
    %v366 = vmul.f32 %v350, 0.5
    %v367 = vmul.f32 %v351, 0.5
    %v368 = vmul.f32 %v352, 0.5
    %v369 = vmul.f32 %v353, 0.5
    %v370 = vmul.f32 %v354, 0.5
    %v371 = vmul.f32 %v355, 0.5
    %v372 = vmul.f32 %v356, 0.5
    %v373 = vmul.f32 %v357, 0.5
    %v374 = vmul.f32 %v358, 0.5
    %v375 = vmul.f32 %v359, 0.5
    %v376 = vmul.f32 %v360, 0.5
    %v377 = vmul.f32 %v361, 0.5
    %v378 = vmul.f32 %v362, 0.5
    %v379 = vmul.f32 %v363, 1.442695
    %v380 = vpow.pop %v379
    %v381 = vmul.f32 %v364, 1.442695
    %v382 = vpow.pop %v381
    %v383 = vmul.f32 %v365, 1.442695
    %v384 = vpow.pop %v383
    %v385 = vmul.f32 %v366, 1.442695
    %v386 = vpow.pop %v385
    %v387 = vmul.f32 %v367, 1.442695
    %v388 = vpow.pop %v387
    %v389 = vmul.f32 %v368, 1.442695
    %v390 = vpow.pop %v389
    %v391 = vmul.f32 %v369, 1.442695
    %v392 = vpow.pop %v391
    %v393 = vmul.f32 %v370, 1.442695
    %v394 = vpow.pop %v393
    %v395 = vmul.f32 %v371, 1.442695
    %v396 = vpow.pop %v395
    %v397 = vmul.f32 %v372, 1.442695
    %v398 = vpow.pop %v397
    %v399 = vmul.f32 %v373, 1.442695
    %v400 = vpow.pop %v399
    %v401 = vmul.f32 %v374, 1.442695
    %v402 = vpow.pop %v401
    %v403 = vmul.f32 %v375, 1.442695
    %v404 = vpow.pop %v403
    %v405 = vmul.f32 %v376, 1.442695
    %v406 = vpow.pop %v405
    %v407 = vmul.f32 %v377, 1.442695
    %v408 = vpow.pop %v407
    %v409 = vmul.f32 %v378, 1.442695
    %v410 = vpow.pop %v409
    %v411 = vadd.f32 %v380, 1e-08
    %v412 = vadd.f32 %v382, 1e-08
    %v413 = vadd.f32 %v384, 1e-08
    %v414 = vadd.f32 %v386, 1e-08
    %v415 = vadd.f32 %v388, 1e-08
    %v416 = vadd.f32 %v390, 1e-08
    %v417 = vadd.f32 %v392, 1e-08
    %v418 = vadd.f32 %v394, 1e-08
    %v419 = vadd.f32 %v396, 1e-08
    %v420 = vadd.f32 %v398, 1e-08
    %v421 = vadd.f32 %v400, 1e-08
    %v422 = vadd.f32 %v402, 1e-08
    %v423 = vadd.f32 %v404, 1e-08
    %v424 = vadd.f32 %v406, 1e-08
    %v425 = vadd.f32 %v408, 1e-08
    %v426 = vadd.f32 %v410, 1e-08
    %v427 = vlog2.pop %v411
    %v428 = vmul.f32 %v427, 0.6931472
    %v429 = vlog2.pop %v412
    %v430 = vmul.f32 %v429, 0.6931472
    %v431 = vlog2.pop %v413
    %v432 = vmul.f32 %v431, 0.6931472
    %v433 = vlog2.pop %v414
    %v434 = vmul.f32 %v433, 0.6931472
    %v435 = vlog2.pop %v415
    %v436 = vmul.f32 %v435, 0.6931472
    %v437 = vlog2.pop %v416
    %v438 = vmul.f32 %v437, 0.6931472
    %v439 = vlog2.pop %v417
    %v440 = vmul.f32 %v439, 0.6931472
    %v441 = vlog2.pop %v418
    %v442 = vmul.f32 %v441, 0.6931472
    %v443 = vlog2.pop %v419
    %v444 = vmul.f32 %v443, 0.6931472
    %v445 = vlog2.pop %v420
    %v446 = vmul.f32 %v445, 0.6931472
    %v447 = vlog2.pop %v421
    %v448 = vmul.f32 %v447, 0.6931472
    %v449 = vlog2.pop %v422
    %v450 = vmul.f32 %v449, 0.6931472
    %v451 = vlog2.pop %v423
    %v452 = vmul.f32 %v451, 0.6931472
    %v453 = vlog2.pop %v424
    %v454 = vmul.f32 %v453, 0.6931472
    %v455 = vlog2.pop %v425
    %v456 = vmul.f32 %v455, 0.6931472
    %v457 = vlog2.pop %v426
    %v458 = vmul.f32 %v457, 0.6931472
    %v459 = vadd.f32 %v428, 1.0
    %v460 = vadd.f32 %v430, 1.0
    %v461 = vadd.f32 %v432, 1.0
    %v462 = vadd.f32 %v434, 1.0
    %v463 = vadd.f32 %v436, 1.0
    %v464 = vadd.f32 %v438, 1.0
    %v465 = vadd.f32 %v440, 1.0
    %v466 = vadd.f32 %v442, 1.0
    %v467 = vadd.f32 %v444, 1.0
    %v468 = vadd.f32 %v446, 1.0
    %v469 = vadd.f32 %v448, 1.0
    %v470 = vadd.f32 %v450, 1.0
    %v471 = vadd.f32 %v452, 1.0
    %v472 = vadd.f32 %v454, 1.0
    %v473 = vadd.f32 %v456, 1.0
    %v474 = vadd.f32 %v458, 1.0
    %s475 = smul.u32 0, 128
    %v476 = vlaneseq
    %v477 = vshrl.u32 %v476, 7
    %v478 = vadd.s32 %v477, 8
    %v479 = vadd.s32 %v477, 16
    %v480 = vadd.s32 %v477, 24
    %v481 = vadd.s32 %v477, 32
    %v482 = vadd.s32 %v477, 40
    %v483 = vadd.s32 %v477, 48
    %v484 = vadd.s32 %v477, 56
    %v485 = vadd.s32 %v477, 64
    %v486 = vadd.s32 %v477, 72
    %v487 = vadd.s32 %v477, 80
    %v488 = vadd.s32 %v477, 88
    %v489 = vadd.s32 %v477, 96
    %v490 = vadd.s32 %v477, 104
    %v491 = vadd.s32 %v477, 112
    %v492 = vadd.s32 %v477, 120
    %v493 = vstv %s475
    %v494 = vadd.s32 %v493, %v477
    %v495 = vadd.s32 %v493, %v478
    %v496 = vadd.s32 %v493, %v479
    %v497 = vadd.s32 %v493, %v480
    %v498 = vadd.s32 %v493, %v481
    %v499 = vadd.s32 %v493, %v482
    %v500 = vadd.s32 %v493, %v483
    %v501 = vadd.s32 %v493, %v484
    %v502 = vadd.s32 %v493, %v485
    %v503 = vadd.s32 %v493, %v486
    %v504 = vadd.s32 %v493, %v487
    %v505 = vadd.s32 %v493, %v488
    %v506 = vadd.s32 %v493, %v489
    %v507 = vadd.s32 %v493, %v490
    %v508 = vadd.s32 %v493, %v491
    %v509 = vadd.s32 %v493, %v492
    %vm510 = vcmp.lt.s32.totalorder %v494, 8
    %vm511 = vcmp.lt.s32.totalorder %v495, 8
    %vm512 = vcmp.lt.s32.totalorder %v496, 8
    %vm513 = vcmp.lt.s32.totalorder %v497, 8
    %vm514 = vcmp.lt.s32.totalorder %v498, 8
    %vm515 = vcmp.lt.s32.totalorder %v499, 8
    %vm516 = vcmp.lt.s32.totalorder %v500, 8
    %vm517 = vcmp.lt.s32.totalorder %v501, 8
    %vm518 = vcmp.lt.s32.totalorder %v502, 8
    %vm519 = vcmp.lt.s32.totalorder %v503, 8
    %vm520 = vcmp.lt.s32.totalorder %v504, 8
    %vm521 = vcmp.lt.s32.totalorder %v505, 8
    %vm522 = vcmp.lt.s32.totalorder %v506, 8
    %vm523 = vcmp.lt.s32.totalorder %v507, 8
    %vm524 = vcmp.lt.s32.totalorder %v508, 8
    %vm525 = vcmp.lt.s32.totalorder %v509, 8
    %v526 = vsel %vm510, %v459, 0.0
    %v527 = vsel %vm511, %v460, 0.0
    %v528 = vsel %vm512, %v461, 0.0
    %v529 = vsel %vm513, %v462, 0.0
    %v530 = vsel %vm514, %v463, 0.0
    %v531 = vsel %vm515, %v464, 0.0
    %v532 = vsel %vm516, %v465, 0.0
    %v533 = vsel %vm517, %v466, 0.0
    %v534 = vsel %vm518, %v467, 0.0
    %v535 = vsel %vm519, %v468, 0.0
    %v536 = vsel %vm520, %v469, 0.0
    %v537 = vsel %vm521, %v470, 0.0
    %v538 = vsel %vm522, %v471, 0.0
    %v539 = vsel %vm523, %v472, 0.0
    %v540 = vsel %vm524, %v473, 0.0
    %v541 = vsel %vm525, %v474, 0.0
    %vm542 = vcmask 7168
    %v543 = vsel %vm542, %v526, 0.0
    %v544 = vsel %vm542, %v527, 0.0
    %v545 = vadd.f32 %v543, %v544
    %v546 = vsel %vm542, %v528, 0.0
    %v547 = vadd.f32 %v545, %v546
    %v548 = vsel %vm542, %v529, 0.0
    %v549 = vadd.f32 %v547, %v548
    %v550 = vsel %vm542, %v530, 0.0
    %v551 = vadd.f32 %v549, %v550
    %v552 = vsel %vm542, %v531, 0.0
    %v553 = vadd.f32 %v551, %v552
    %v554 = vsel %vm542, %v532, 0.0
    %v555 = vadd.f32 %v553, %v554
    %v556 = vsel %vm542, %v533, 0.0
    %v557 = vadd.f32 %v555, %v556
    %v558 = vsel %vm542, %v534, 0.0
    %v559 = vadd.f32 %v557, %v558
    %v560 = vsel %vm542, %v535, 0.0
    %v561 = vadd.f32 %v559, %v560
    %v562 = vsel %vm542, %v536, 0.0
    %v563 = vadd.f32 %v561, %v562
    %v564 = vsel %vm542, %v537, 0.0
    %v565 = vadd.f32 %v563, %v564
    %v566 = vsel %vm542, %v538, 0.0
    %v567 = vadd.f32 %v565, %v566
    %v568 = vsel %vm542, %v539, 0.0
    %v569 = vadd.f32 %v567, %v568
    %v570 = vsel %vm542, %v540, 0.0
    %v571 = vadd.f32 %v569, %v570
    %v572 = vsel %vm542, %v541, 0.0
    %v573 = vadd.f32 %v571, %v572
    %574 = vadd.xlane.f32.xlu0 %v573
    %v575 = vpop.xlane.xlu0 %574
    %v576 = vrot.slane %v575, 4
    %v577 = vadd.f32 %v575, %v576
    %v578 = vrot.slane %v577, 2
    %v579 = vadd.f32 %v577, %v578
    %v580 = vrot.slane %v579, 1
    %v581 = vadd.f32 %v579, %v580
    %s582 = vtos %v581
    %v583 = vstv %s582
    %584 = vst [vmem:[#allocation8] sm:$0xff] %v583
    // Predicated region
    $region18: #{tpu_custom_call.1} parent=1 // pred_check
      _
    $region19: #{tpu_custom_call.1} parent=1 // pred_check_branch
      %586 = sbr.rel (0) target = $region21
    $region20: #{tpu_custom_call.1} parent=1 // pred_region
      %s588 = ssub.s32 2048, 2048
      %589 = vsyncadd [#allocation4], %s588
      %s590 = sshll.u32 [#allocation7], 4
      %s591 = int_to_ptr.vmem [resolvable:$true] %s590
      %596 = dma.vmem_to_hbm [thread:$0]  %s591, 2048, %s2, [#allocation4], 128, 128, 8
    $region21: #{tpu_custom_call.1} parent=1 // pred_fallthru
      _
    // Predicated region
    $region22: #{tpu_custom_call.1} parent=1 // pred_check
      _
    $region23: #{tpu_custom_call.1} parent=1 // pred_check_branch
      %598 = sbr.rel (0) target = $region25
    $region24: #{tpu_custom_call.1} parent=1 // pred_region
      %s600 = ssub.s32 128, 128
      %601 = vsyncadd [#allocation9], %s600
      %s603 = sshll.u32 [#allocation8], 4
      %s604 = int_to_ptr.vmem [resolvable:$true] %s603
      %606 = dma.vmem_to_hbm [thread:$0]  %s604, 128, %s3, [#allocation9]
    $region25: #{tpu_custom_call.1} parent=1 // pred_fallthru
      _
    // Predicated region
    $region26: #{tpu_custom_call.1} parent=1 // pred_check
      _
    $region27: #{tpu_custom_call.1} parent=1 // pred_check_branch
      %608 = sbr.rel (0) target = $region29
    $region28: #{tpu_custom_call.1} parent=1 // pred_region
      %609 = dma.done [#allocation4], 2048
    $region29: #{tpu_custom_call.1} parent=1 // pred_fallthru
      _
    // Predicated region
    $region30: #{tpu_custom_call.1} parent=1 // pred_check
      _
    $region31: #{tpu_custom_call.1} parent=1 // pred_check_branch
      %611 = sbr.rel (0) target = $region33
    $region32: #{tpu_custom_call.1} parent=1 // pred_region
      %612 = dma.done [#allocation9], 128
    $region33: #{tpu_custom_call.1} parent=1 // pred_fallthru
      _
    %613 = vsyncpa [#allocation3], 1
    %614 = vsyncpa [#allocation6], 1
    %615 = vsyncpa [#allocation4], 1
    %616 = vsyncpa [#allocation9], 1

</llo_original>
